<compile_context>
chip_gen: v5e
topology: v5e:2x2
jax: 0.10.0
libtpu: 0.0.40
codegen_flags: <defaults>
</compile_context>

<pallas_src>
import functools

import jax
import jax.numpy as jnp
from jax import lax
from jax.experimental import pallas as pl
from jax.experimental.pallas import tpu as pltpu

FEAT = 32     # feat_size produced by the (stand-in) backbone
OUT = 20      # output_size of ModelProgression
LN_EPS = 1e-6


# ---------------------------------------------------------------------------
# Fused kernel.
#   x_ref:   (Bblk, C, T)  bf16 spatial tile (HW lane-dense)
#   wT_ref:  (FEAT, C)     bf16 1x1-conv weight, transposed
#   pp_ref:  (FEAT, 3)     f32 packed params: [-b_conv | ln_gamma | ln_beta]
#   wfc_ref: (FEAT, OUT)   f32 Linear weight
#   bfc_ref: (1, OUT)      f32 Linear bias
#   o_ref:   (Bblk, 1, OUT) per-block output
#   acc_ref: (FEAT, Bblk)  f32 running spatial sums (VMEM scratch)
# ---------------------------------------------------------------------------
def _fused_kernel(x_ref, wT_ref, pp_ref, wfc_ref, bfc_ref, o_ref, acc_ref,
                  *, inv_hw, bblk):
    hw = pl.program_id(1)

    @pl.when(hw == 0)
    def _init():
        acc_ref[...] = jnp.zeros_like(acc_ref)

    neg_b = pp_ref[:, 0:1]                                  # (FEAT, 1) == -b_conv

    # Static unroll over the samples packed into this grid step; each
    # iteration is fully lane/sublane-dense ((FEAT, T) intermediates).
    for s in range(bblk):
        x_s = x_ref[s]                                      # (C, T) bf16
        y = jnp.dot(wT_ref[...], x_s,
                    preferred_element_type=jnp.float32)     # (FEAT, T) f32
        # ReLU(Wx + b) == max(Wx, -b) + b ; the "+b" is folded into the
        # GAP finalize, saving a per-step VALU add + broadcast over (FEAT,T).
        y = jnp.maximum(y, neg_b)
        acc_ref[:, s:s + 1] += jnp.sum(y, axis=1, keepdims=True)

    @pl.when(hw == pl.num_programs(1) - 1)
    def _finalize():
        gamma = pp_ref[:, 1:2]                              # (FEAT, 1)
        beta = pp_ref[:, 2:3]                               # (FEAT, 1)
        # GAP (+ the deferred conv bias): feat[f, s] per sample column.
        feat = acc_ref[...] * inv_hw - neg_b                # (FEAT, Bblk)
        # LayerNorm over FEAT (biased variance, eps inside rsqrt, affine).
        mean = jnp.mean(feat, axis=0, keepdims=True)        # (1, Bblk)
        var = jnp.mean((feat - mean) ** 2, axis=0, keepdims=True)
        xn = (feat - mean) * lax.rsqrt(var + LN_EPS)
        xn = xn * gamma + beta                              # (FEAT, Bblk)
        # Linear(FEAT, OUT) per sample (runs once per sample -> cost ~0).
        for s in range(bblk):
            row = jnp.sum(xn[:, s:s + 1] * wfc_ref[...], axis=0,
                          keepdims=True) + bfc_ref[...]     # (1, OUT)
            o_ref[s] = row


def _pick_hw_tile(hw, cap=16384):
    """Largest 128-aligned divisor of HW up to `cap` (or full HW fallback)."""
    if hw % 128 != 0:
        # TODO(synk): non-lane-aligned HW -> masked loads; padding + masked
        # GAP would be faster but is not needed for typical backbone shapes.
        return hw
    best = 128
    for k in range(1, min(hw, cap) // 128 + 1):
        t = 128 * k
        if hw % t == 0:
            best = t
    return best


def _pick_batch_block(batch, tile, cap_elems=32768):
    """Samples per grid step: divisor of B, Bblk*T <= cap, and keep >= 2
    blocks along the parallel axis when B >= 2 (feed both v7x cores)."""
    max_blk = max(1, cap_elems // tile)
    best = 1
    for blk in range(1, batch + 1):
        if batch % blk != 0 or blk > max_blk:
            continue
        if batch >= 2 and batch // blk < 2:
            continue
        best = blk
    return best


# ---------------------------------------------------------------------------
# Full ModelProgression.forward
# ---------------------------------------------------------------------------
def model_progression_forward(x_nchw, params):
    B, C, H, W = x_nchw.shape
    HW = H * W

    # Free reshape from NCHW (HW lane-dense); stream x / conv weight in bf16.
    x = x_nchw.reshape(B, C, HW).astype(jnp.bfloat16)
    w_conv = params["w_conv_t"].astype(jnp.bfloat16)
    # Packed small params: [-b_conv | ln_gamma | ln_beta]  -> one DMA block.
    pp = jnp.concatenate(
        [-params["b_conv"], params["ln_gamma"], params["ln_beta"]], axis=1)

    T = _pick_hw_tile(HW)
    n_hw = HW // T
    Bblk = _pick_batch_block(B, T)
    n_b = B // Bblk

    kernel = functools.partial(_fused_kernel, inv_hw=1.0 / HW, bblk=Bblk)

    grid_spec = pltpu.PrefetchScalarGridSpec(
        num_scalar_prefetch=0,
        grid=(n_b, n_hw),
        in_specs=[
            pl.BlockSpec((Bblk, C, T), lambda b, hw: (b, 0, hw)),   # x tile
            pl.BlockSpec((FEAT, C), lambda b, hw: (0, 0)),          # conv W^T
            pl.BlockSpec((FEAT, 3), lambda b, hw: (0, 0)),          # packed params
            pl.BlockSpec((FEAT, OUT), lambda b, hw: (0, 0)),        # fc weight
            pl.BlockSpec((1, OUT), lambda b, hw: (0, 0)),           # fc bias
        ],
        out_specs=pl.BlockSpec((Bblk, 1, OUT), lambda b, hw: (b, 0, 0)),
        scratch_shapes=[pltpu.VMEM((FEAT, Bblk), jnp.float32)],
    )

    out = pl.pallas_call(
        kernel,
        out_shape=jax.ShapeDtypeStruct((B, 1, OUT), jnp.float32),
        grid_spec=grid_spec,
        compiler_params=pltpu.CompilerParams(
            dimension_semantics=("parallel", "arbitrary"),
            # Large spatial tiles need more than the default scoped VMEM
            # (16 MiB on v5e); 48 MiB fits v7x's 64 MiB physical per-TC VMEM.
            vmem_limit_bytes=48 * 1024 * 1024),
    )(x, w_conv, pp, params["w_fc"], params["b_fc"])

    # TODO(synk): nn.Dropout() is identity at inference; no stochastic masking.
    return out.reshape(B, OUT)


def init_params(key, in_channels):
    k1, k2, k3, k4 = jax.random.split(key, 4)
    return {
        # stand-in backbone: 1x1 conv C -> FEAT, stored transposed (FEAT, C)
        "w_conv_t": jax.random.normal(k1, (FEAT, in_channels), jnp.float32) * 0.1,
        "b_conv": jax.random.normal(k2, (FEAT, 1), jnp.float32) * 0.01,
        # LayerNorm(FEAT, eps=1e-6, elementwise_affine=True), column layout
        "ln_gamma": jnp.ones((FEAT, 1), jnp.float32),
        "ln_beta": jnp.zeros((FEAT, 1), jnp.float32),
        # Linear(FEAT, OUT, bias=True) (weight stored as (FEAT, OUT))
        "w_fc": jax.random.normal(k3, (FEAT, OUT), jnp.float32) * 0.05,
        "b_fc": jax.random.normal(k4, (1, OUT), jnp.float32) * 0.01,
    }


def _reference_forward(x_nchw, params):
    """Pure-JAX reference.  The conv inputs are rounded to bf16 to mirror the
    kernel's bf16 streaming (accumulation and everything else stays f32)."""
    B, C, H, W = x_nchw.shape
    x = x_nchw.reshape(B, C, H * W)
    xb = x.astype(jnp.bfloat16).astype(jnp.float32)
    wb = params["w_conv_t"].astype(jnp.bfloat16).astype(jnp.float32)
    y = jnp.einsum("fc,bcs->bfs", wb, xb) + params["b_conv"][None]
    y = jnp.maximum(y, 0.0)
    feat = jnp.mean(y, axis=2)                                      # (B, FEAT)
    mean = jnp.mean(feat, axis=1, keepdims=True)
    var = jnp.mean((feat - mean) ** 2, axis=1, keepdims=True)
    xn = (feat - mean) / jnp.sqrt(var + LN_EPS)
    xn = xn * params["ln_gamma"][:, 0][None] + params["ln_beta"][:, 0][None]
    return xn @ params["w_fc"] + params["b_fc"]


if __name__ == "__main__":
    key = jax.random.PRNGKey(0)
    kx, kp = jax.random.split(key)

    B, C, H, W = 2, 4, 16, 16
    x = jax.random.normal(kx, (B, C, H, W), jnp.float32)
    params = init_params(kp, C)

    out = jax.block_until_ready(model_progression_forward(x, params))

    assert out.shape == (B, OUT), out.shape
    assert out.dtype == jnp.float32
    assert bool(jnp.all(jnp.isfinite(out)))

    ref = _reference_forward(x, params)
    assert jnp.allclose(out, ref, rtol=1e-2, atol=1e-2), float(
        jnp.max(jnp.abs(out - ref)))

    print("KERNEL_OK")
</pallas_src>

<mosaic_0001>
module attributes {stable_mosaic.version = 11 : i64} {
  func.func @_fused_kernel(%arg0: i32, %arg1: i32, %arg2: memref<1x4x256xbf16, #tpu.memory_space<vmem>>, %arg3: memref<32x4xbf16, #tpu.memory_space<vmem>>, %arg4: memref<32x3xf32, #tpu.memory_space<vmem>>, %arg5: memref<32x20xf32, #tpu.memory_space<vmem>>, %arg6: memref<1x20xf32, #tpu.memory_space<vmem>>, %arg7: memref<1x1x20xf32, #tpu.memory_space<vmem>>, %arg8: memref<32x1xf32, #tpu.memory_space<vmem>>) attributes {dimension_semantics = [#tpu.dimension_semantics<parallel>, #tpu.dimension_semantics<arbitrary>], iteration_bounds = array<i64: 2, 1>, scalar_prefetch = 0 : i64, scratch_operands = 1 : i64, tpu.core_type = #tpu.core_type<tc>, window_params = [{transform_indices = @transform_0, window_bounds = array<i64: 1, 4, 256>}, {pipeline_mode = #tpu.pipeline_mode<synchronous>, transform_indices = @transform_1, window_bounds = array<i64: 32, 4>}, {pipeline_mode = #tpu.pipeline_mode<synchronous>, transform_indices = @transform_2, window_bounds = array<i64: 32, 3>}, {pipeline_mode = #tpu.pipeline_mode<synchronous>, transform_indices = @transform_3, window_bounds = array<i64: 32, 20>}, {pipeline_mode = #tpu.pipeline_mode<synchronous>, transform_indices = @transform_4, window_bounds = array<i64: 1, 20>}, {transform_indices = @transform_5, window_bounds = array<i64: 1, 1, 20>}]} {
    %c0_i32 = arith.constant 0 : i32
    %0 = arith.cmpi eq, %arg1, %c0_i32 : i32
    %1 = arith.extui %0 : i1 to i32
    %c0_i32_0 = arith.constant 0 : i32
    %2 = arith.cmpi ne, %1, %c0_i32_0 : i32
    scf.if %2 {
      %cst_14 = arith.constant 0.000000e+00 : f32
      %18 = vector.broadcast %cst_14 : f32 to vector<32x1xf32>
      %c0_15 = arith.constant 0 : index
      %c0_16 = arith.constant 0 : index
      %19 = vector.load %arg8[%c0_15, %c0_16] : memref<32x1xf32, #tpu.memory_space<vmem>>, vector<32x1xf32>
      tpu.vector_store %arg8[%c0_15, %c0_16], %18 {strides = array<i32>} : memref<32x1xf32, #tpu.memory_space<vmem>>, vector<32x1xf32>,
    } else {
    }
    %c0 = arith.constant 0 : index
    %c0_1 = arith.constant 0 : index
    %3 = vector.load %arg4[%c0, %c0_1] : memref<32x3xf32, #tpu.memory_space<vmem>>, vector<32x1xf32>
    %c0_2 = arith.constant 0 : index
    %c0_3 = arith.constant 0 : index
    %c0_4 = arith.constant 0 : index
    %4 = vector.load %arg2[%c0_2, %c0_3, %c0_4] : memref<1x4x256xbf16, #tpu.memory_space<vmem>>, vector<1x4x256xbf16>
    %5 = vector.shape_cast %4 : vector<1x4x256xbf16> to vector<4x256xbf16>
    %c0_5 = arith.constant 0 : index
    %c0_6 = arith.constant 0 : index
    %6 = vector.load %arg3[%c0_5, %c0_6] : memref<32x4xbf16, #tpu.memory_space<vmem>>, vector<32x4xbf16>
    %cst = arith.constant dense<0.000000e+00> : vector<32x256xf32>
    %7 = tpu.matmul %6, %5, %cst {dimension_numbers = #tpu.dot_dimension_numbers<[1], [0], [0], [1], [0, 0, 1, 1], [], []>} : vector<32x4xbf16>, vector<4x256xbf16>, vector<32x256xf32> -> vector<32x256xf32>
    %8 = vector.broadcast %3 : vector<32x1xf32> to vector<32x256xf32>
    %9 = arith.maximumf %7, %8 : vector<32x256xf32>
    %c0_7 = arith.constant 0 : index
    %c0_8 = arith.constant 0 : index
    %10 = vector.load %arg8[%c0_7, %c0_8] : memref<32x1xf32, #tpu.memory_space<vmem>>, vector<32x1xf32>
    %cst_9 = arith.constant dense<0.000000e+00> : vector<32xf32>
    %11 = vector.multi_reduction <add>, %9, %cst_9 [1] : vector<32x256xf32> to vector<32xf32>
    %12 = vector.shape_cast %11 : vector<32xf32> to vector<32x1xf32>
    %13 = arith.addf %10, %12 : vector<32x1xf32>
    %c0_10 = arith.constant 0 : index
    %c0_11 = arith.constant 0 : index
    %14 = vector.load %arg8[%c0_10, %c0_11] : memref<32x1xf32, #tpu.memory_space<vmem>>, vector<32x1xf32>
    tpu.vector_store %arg8[%c0_10, %c0_11], %13 {strides = array<i32>} : memref<32x1xf32, #tpu.memory_space<vmem>>, vector<32x1xf32>,
    %c0_i32_12 = arith.constant 0 : i32
    %15 = arith.cmpi eq, %arg1, %c0_i32_12 : i32
    %16 = arith.extui %15 : i1 to i32
    %c0_i32_13 = arith.constant 0 : i32
    %17 = arith.cmpi ne, %16, %c0_i32_13 : i32
    scf.if %17 {
      %c0_14 = arith.constant 0 : index
      %c1 = arith.constant 1 : index
      %18 = vector.load %arg4[%c0_14, %c1] : memref<32x3xf32, #tpu.memory_space<vmem>>, vector<32x1xf32>
      %c0_15 = arith.constant 0 : index
      %c2 = arith.constant 2 : index
      %19 = vector.load %arg4[%c0_15, %c2] : memref<32x3xf32, #tpu.memory_space<vmem>>, vector<32x1xf32>
      %c0_16 = arith.constant 0 : index
      %c0_17 = arith.constant 0 : index
      %20 = vector.load %arg8[%c0_16, %c0_17] : memref<32x1xf32, #tpu.memory_space<vmem>>, vector<32x1xf32>
      %cst_18 = arith.constant 3.906250e-03 : f32
      %21 = vector.broadcast %cst_18 : f32 to vector<32x1xf32>
      %22 = arith.mulf %20, %21 : vector<32x1xf32>
      %23 = arith.subf %22, %3 : vector<32x1xf32>
      %cst_19 = arith.constant dense<0.000000e+00> : vector<1xf32>
      %24 = vector.multi_reduction <add>, %23, %cst_19 [0] : vector<32x1xf32> to vector<1xf32>
      %25 = vector.shape_cast %24 : vector<1xf32> to vector<1x1xf32>
      %cst_20 = arith.constant 3.200000e+01 : f32
      %26 = vector.broadcast %cst_20 : f32 to vector<1x1xf32>
      %27 = arith.divf %25, %26 : vector<1x1xf32>
      %28 = vector.broadcast %27 : vector<1x1xf32> to vector<32x1xf32>
      %29 = arith.subf %23, %28 : vector<32x1xf32>
      %30 = arith.mulf %29, %29 : vector<32x1xf32>
      %cst_21 = arith.constant dense<0.000000e+00> : vector<1xf32>
      %31 = vector.multi_reduction <add>, %30, %cst_21 [0] : vector<32x1xf32> to vector<1xf32>
      %32 = vector.shape_cast %31 : vector<1xf32> to vector<1x1xf32>
      %cst_22 = arith.constant 3.200000e+01 : f32
      %33 = vector.broadcast %cst_22 : f32 to vector<1x1xf32>
      %34 = arith.divf %32, %33 : vector<1x1xf32>
      %35 = vector.broadcast %27 : vector<1x1xf32> to vector<32x1xf32>
      %36 = arith.subf %23, %35 : vector<32x1xf32>
      %cst_23 = arith.constant 9.99999997E-7 : f32
      %37 = vector.broadcast %cst_23 : f32 to vector<1x1xf32>
      %38 = arith.addf %34, %37 : vector<1x1xf32>
      %39 = math.rsqrt %38 : vector<1x1xf32>
      %40 = vector.broadcast %39 : vector<1x1xf32> to vector<32x1xf32>
      %41 = arith.mulf %36, %40 : vector<32x1xf32>
      %42 = arith.mulf %41, %18 : vector<32x1xf32>
      %43 = arith.addf %42, %19 : vector<32x1xf32>
      %c0_24 = arith.constant 0 : index
      %c0_25 = arith.constant 0 : index
      %44 = vector.load %arg5[%c0_24, %c0_25] : memref<32x20xf32, #tpu.memory_space<vmem>>, vector<32x20xf32>
      %45 = vector.broadcast %43 : vector<32x1xf32> to vector<32x20xf32>
      %46 = arith.mulf %45, %44 : vector<32x20xf32>
      %cst_26 = arith.constant dense<0.000000e+00> : vector<20xf32>
      %47 = vector.multi_reduction <add>, %46, %cst_26 [0] : vector<32x20xf32> to vector<20xf32>
      %48 = vector.shape_cast %47 : vector<20xf32> to vector<1x20xf32>
      %c0_27 = arith.constant 0 : index
      %c0_28 = arith.constant 0 : index
      %49 = vector.load %arg6[%c0_27, %c0_28] : memref<1x20xf32, #tpu.memory_space<vmem>>, vector<1x20xf32>
      %50 = arith.addf %48, %49 : vector<1x20xf32>
      %c0_29 = arith.constant 0 : index
      %c0_30 = arith.constant 0 : index
      %c0_31 = arith.constant 0 : index
      %51 = vector.load %arg7[%c0_29, %c0_30, %c0_31] : memref<1x1x20xf32, #tpu.memory_space<vmem>>, vector<1x1x20xf32>
      %52 = vector.shape_cast %51 : vector<1x1x20xf32> to vector<1x20xf32>
      %53 = vector.shape_cast %50 : vector<1x20xf32> to vector<1x1x20xf32>
      tpu.vector_store %arg7[%c0_29, %c0_30, %c0_31], %53 {strides = array<i32>} : memref<1x1x20xf32, #tpu.memory_space<vmem>>, vector<1x1x20xf32>,
    } else {
    }
    return
  }
  func.func @transform_0(%arg0: i32, %arg1: i32) -> (i32, i32, i32) {
    %c0_i32 = arith.constant 0 : i32
    %c0_i32_0 = arith.constant 0 : i32
    return %arg0, %c0_i32, %arg1 : i32, i32, i32
  }
  func.func @transform_1(%arg0: i32, %arg1: i32) -> (i32, i32) {
    %c0_i32 = arith.constant 0 : i32
    %c0_i32_0 = arith.constant 0 : i32
    %c0_i32_1 = arith.constant 0 : i32
    return %c0_i32, %c0_i32_0 : i32, i32
  }
  func.func @transform_2(%arg0: i32, %arg1: i32) -> (i32, i32) {
    %c0_i32 = arith.constant 0 : i32
    %c0_i32_0 = arith.constant 0 : i32
    %c0_i32_1 = arith.constant 0 : i32
    return %c0_i32, %c0_i32_0 : i32, i32
  }
  func.func @transform_3(%arg0: i32, %arg1: i32) -> (i32, i32) {
    %c0_i32 = arith.constant 0 : i32
    %c0_i32_0 = arith.constant 0 : i32
    %c0_i32_1 = arith.constant 0 : i32
    return %c0_i32, %c0_i32_0 : i32, i32
  }
  func.func @transform_4(%arg0: i32, %arg1: i32) -> (i32, i32) {
    %c0_i32 = arith.constant 0 : i32
    %c0_i32_0 = arith.constant 0 : i32
    %c0_i32_1 = arith.constant 0 : i32
    return %c0_i32, %c0_i32_0 : i32, i32
  }
  func.func @transform_5(%arg0: i32, %arg1: i32) -> (i32, i32, i32) {
    %c0_i32 = arith.constant 0 : i32
    %c0_i32_0 = arith.constant 0 : i32
    %c0_i32_1 = arith.constant 0 : i32
    return %arg0, %c0_i32, %c0_i32_0 : i32, i32, i32
  }
}

</mosaic_0001>

<llo_original>
// kernel: tpu_custom_call.1
$region0: #{tpu_custom_call.1}
  #allocation0 [shape = 'u32[]', space=smem, size = 0x4, offset = 0x4, fixed_abs, tag = 'smem constant byte address 0x4 - core index']
  #allocation1 [shape = 'u32[72,128]{1,0:T(1,128)}', space=vmem, size = 0x9000, scoped, tag = 'internal scratch']
  #allocation2 [shape = 'f32[32,1]{1,0:T(8,128)}', space=vmem, size = 0x4000, scoped, tag = 'scratch operand']
  %s0 = inlined_call_operand.vmem [shape: bf16[2,4,256], index: 0, kind: input, shape index: {}]
  %s1 = inlined_call_operand.vmem [shape: bf16[32,4], index: 1, kind: input, shape index: {}]
  %s2 = inlined_call_operand.vmem [shape: f32[32,3], index: 2, kind: input, shape index: {}]
  %s3 = inlined_call_operand.vmem [shape: f32[32,20], index: 3, kind: input, shape index: {}]
  %s4 = inlined_call_operand.vmem [shape: f32[1,20], index: 4, kind: input, shape index: {}]
  %s5 = inlined_call_operand.hbm [shape: f32[2,1,20], index: 5, kind: output, shape index: {}]
  %s6 = sld [smem:[#allocation0]]
  $region61: #{tpu_custom_call.1} parent=0
    _
  %s8 = ssub.s32 1, %s6
  %s9 = scalar_select 0, %s8, %s6
  $region1: #{tpu_custom_call.1} parent=0
    #allocation3 [shape = 'u8[1024]{0}', space=vmem, size = 0x400, scoped, tag = 'output window, operand 0']
    #allocation4 [shape = 's32[2]{0}', space=sflag, size = 0x8, scoped, tag = 'scoped memory for tpu_custom_call.1']
    %10 = vsyncpa [#allocation4], 0
    %s11 = scalar_lea.sflag [#allocation4], 1
    %12 = vsyncpa %s11, 0
    loop: start=0, step=1, limit=4
    $region2: #{tpu_custom_call.1} parent=1 // loop_pre_header
      _
    $region3: #{tpu_custom_call.1} parent=1 // loop_header
      %s14 = sphi 0, %s18
      %p15 = scmp.ge.s32.totalorder %s14, 4
      %s21 = sphi 0, %s33
      %s22 = sphi 0, %s29
      %s23 = sphi 0, %s21
      %s24 = sphi 0, %s22
      %s25 = sphi 0, %s23
      %s26 = sphi 0, %s24
      %s38 = sphi 0, %s40
      %s41 = sphi 0, %s38
      %s42 = sphi 0, %s41
      %s58 = sphi 0, %s42
      %s62 = sphi 0, %s62
      %s64 = sphi 0, %s62
      %s65 = sphi 0, %s64
      %s79 = sphi 0, %s65
      %s83 = sphi 0, %s83
      %s85 = sphi 0, %s83
      %s86 = sphi 0, %s85
      %s100 = sphi 0, %s86
      %s104 = sphi 0, %s104
      %s106 = sphi 0, %s104
      %s107 = sphi 0, %s106
      %s121 = sphi 0, %s107
      %s125 = sphi 0, %s125
      %s127 = sphi 0, %s125
      %s128 = sphi 0, %s127
      %s142 = sphi 0, %s128
      %s148 = sphi 0, %s150
      %s151 = sphi 0, %s148
      %s152 = sphi 0, %s151
      %s168 = sphi 0, %s152
    $region4: #{tpu_custom_call.1} parent=1 // loop_header_branch
      %17 = sbr.rel (%p15) target = $region8
    $region5: #{tpu_custom_call.1} parent=1 // loop_body
      %s19 = ssub.s32 %s14, 1
      %s20 = ssub.s32 %s14, 2
      %s27 = sadd.s32 1, %s22
      %p28 = scmp.ge.s32.totalorder %s27, 1
      %s29 = scalar_select %p28, 0, %s27
      %s30 = sadd.s32 1, %s21
      %s31 = scalar_select %p28, %s30, %s21
      %p32 = scmp.ge.s32.totalorder %s31, 2
      %s33 = scalar_select %p32, 0, %s31
      %s34 = ssub.s32 %s21, %s33
      %s35 = ssub.s32 %s22, %s29
      %s36 = sor.u32 %s34, %s35
      %p37 = scmp.eq.s32.totalorder %s36, 0
      %s39 = sadd.s32 %s38, 1
      %s40 = scalar_select %p37, %s38, %s39
      %p43 = pneg %p37
      %p44 = scmp.eq.s32.totalorder %s14, 1
      %p45 = por %p43, %p44
      %p46 = scmp.ne.s32.totalorder %s38, %s41
      %p47 = scmp.eq.s32.totalorder %s14, 0
      %p48 = por %p46, %p47
      %p49 = scmp.ne.s32.totalorder %s38, %s41
      %p50 = scmp.eq.s32.totalorder %s19, 1
      %p51 = por %p49, %p50
      %p52 = scmp.ne.s32.totalorder %s41, %s42
      %p53 = scmp.eq.s32.totalorder %s19, 0
      %p54 = por %p52, %p53
      %p55 = scmp.ne.s32.totalorder %s41, %s42
      %p56 = scmp.eq.s32.totalorder %s20, 1
      %p57 = por %p55, %p56
      %p59 = scmp.ne.s32.totalorder %s42, %s58
      %p60 = scmp.eq.s32.totalorder %s20, 0
      %p61 = por %p59, %p60
      %s63 = sadd.s32 %s62, 1
      %p66 = scmp.eq.s32.totalorder %s14, 1
      %p67 = scmp.ne.s32.totalorder %s62, %s64
      %p68 = scmp.eq.s32.totalorder %s14, 0
      %p69 = por %p67, %p68
      %p70 = scmp.ne.s32.totalorder %s62, %s64
      %p71 = scmp.eq.s32.totalorder %s19, 1
      %p72 = por %p70, %p71
      %p73 = scmp.ne.s32.totalorder %s64, %s65
      %p74 = scmp.eq.s32.totalorder %s19, 0
      %p75 = por %p73, %p74
      %p76 = scmp.ne.s32.totalorder %s64, %s65
      %p77 = scmp.eq.s32.totalorder %s20, 1
      %p78 = por %p76, %p77
      %p80 = scmp.ne.s32.totalorder %s65, %s79
      %p81 = scmp.eq.s32.totalorder %s20, 0
      %p82 = por %p80, %p81
      %s84 = sadd.s32 %s83, 1
      %p87 = scmp.eq.s32.totalorder %s14, 1
      %p88 = scmp.ne.s32.totalorder %s83, %s85
      %p89 = scmp.eq.s32.totalorder %s14, 0
      %p90 = por %p88, %p89
      %p91 = scmp.ne.s32.totalorder %s83, %s85
      %p92 = scmp.eq.s32.totalorder %s19, 1
      %p93 = por %p91, %p92
      %p94 = scmp.ne.s32.totalorder %s85, %s86
      %p95 = scmp.eq.s32.totalorder %s19, 0
      %p96 = por %p94, %p95
      %p97 = scmp.ne.s32.totalorder %s85, %s86
      %p98 = scmp.eq.s32.totalorder %s20, 1
      %p99 = por %p97, %p98
      %p101 = scmp.ne.s32.totalorder %s86, %s100
      %p102 = scmp.eq.s32.totalorder %s20, 0
      %p103 = por %p101, %p102
      %s105 = sadd.s32 %s104, 1
      %p108 = scmp.eq.s32.totalorder %s14, 1
      %p109 = scmp.ne.s32.totalorder %s104, %s106
      %p110 = scmp.eq.s32.totalorder %s14, 0
      %p111 = por %p109, %p110
      %p112 = scmp.ne.s32.totalorder %s104, %s106
      %p113 = scmp.eq.s32.totalorder %s19, 1
      %p114 = por %p112, %p113
      %p115 = scmp.ne.s32.totalorder %s106, %s107
      %p116 = scmp.eq.s32.totalorder %s19, 0
      %p117 = por %p115, %p116
      %p118 = scmp.ne.s32.totalorder %s106, %s107
      %p119 = scmp.eq.s32.totalorder %s20, 1
      %p120 = por %p118, %p119
      %p122 = scmp.ne.s32.totalorder %s107, %s121
      %p123 = scmp.eq.s32.totalorder %s20, 0
      %p124 = por %p122, %p123
      %s126 = sadd.s32 %s125, 1
      %p129 = scmp.eq.s32.totalorder %s14, 1
      %p130 = scmp.ne.s32.totalorder %s125, %s127
      %p131 = scmp.eq.s32.totalorder %s14, 0
      %p132 = por %p130, %p131
      %p133 = scmp.ne.s32.totalorder %s125, %s127
      %p134 = scmp.eq.s32.totalorder %s19, 1
      %p135 = por %p133, %p134
      %p136 = scmp.ne.s32.totalorder %s127, %s128
      %p137 = scmp.eq.s32.totalorder %s19, 0
      %p138 = por %p136, %p137
      %p139 = scmp.ne.s32.totalorder %s127, %s128
      %p140 = scmp.eq.s32.totalorder %s20, 1
      %p141 = por %p139, %p140
      %p143 = scmp.ne.s32.totalorder %s128, %s142
      %p144 = scmp.eq.s32.totalorder %s20, 0
      %p145 = por %p143, %p144
      %s146 = ssub.s32 %s21, %s33
      %p147 = scmp.eq.s32.totalorder %s146, 0
      %s149 = sadd.s32 %s148, 1
      %s150 = scalar_select %p147, %s148, %s149
      %p153 = pneg %p147
      %p154 = scmp.eq.s32.totalorder %s14, 1
      %p155 = por %p153, %p154
      %p156 = scmp.ne.s32.totalorder %s148, %s151
      %p157 = scmp.eq.s32.totalorder %s14, 0
      %p158 = por %p156, %p157
      %p159 = scmp.ne.s32.totalorder %s148, %s151
      %p160 = scmp.eq.s32.totalorder %s19, 1
      %p161 = por %p159, %p160
      %p162 = scmp.ne.s32.totalorder %s151, %s152
      %p163 = scmp.eq.s32.totalorder %s19, 0
      %p164 = por %p162, %p163
      %p165 = scmp.ne.s32.totalorder %s151, %s152
      %p166 = scmp.eq.s32.totalorder %s20, 1
      %p167 = por %p165, %p166
      %p169 = scmp.ne.s32.totalorder %s152, %s168
      %p170 = scmp.eq.s32.totalorder %s20, 0
      %p171 = por %p169, %p170
      %p172 = scmp.le.s32.totalorder 1, %s14
      %p173 = scmp.lt.s32.totalorder %s14, 3
      %p174 = pnand %p172, %p173
      %p175 = pneg %p174
      // Predicated region
      $region9: #{tpu_custom_call.1} parent=5 // pred_check
        _
      $region10: #{tpu_custom_call.1} parent=5 // pred_check_branch
        %177 = sbr.rel (%p174) target = $region12
      $region11: #{tpu_custom_call.1} parent=5 // pred_region
        %s178 = ssub.s32 %s14, 1
        // Predicated region
        $region13: #{tpu_custom_call.1} parent=11 // pred_check
          %p179 = pneg %p75
        $region14: #{tpu_custom_call.1} parent=11 // pred_check_branch
          %181 = sbr.rel (%p179) target = $region16
        $region15: #{tpu_custom_call.1} parent=11 // pred_region
          _
        $region16: #{tpu_custom_call.1} parent=11 // pred_fallthru
          _
        // Predicated region
        $region17: #{tpu_custom_call.1} parent=11 // pred_check
          %p182 = pneg %p96
        $region18: #{tpu_custom_call.1} parent=11 // pred_check_branch
          %184 = sbr.rel (%p182) target = $region20
        $region19: #{tpu_custom_call.1} parent=11 // pred_region
          _
        $region20: #{tpu_custom_call.1} parent=11 // pred_fallthru
          _
        // Predicated region
        $region21: #{tpu_custom_call.1} parent=11 // pred_check
          %p185 = pneg %p117
        $region22: #{tpu_custom_call.1} parent=11 // pred_check_branch
          %187 = sbr.rel (%p185) target = $region24
        $region23: #{tpu_custom_call.1} parent=11 // pred_region
          _
        $region24: #{tpu_custom_call.1} parent=11 // pred_fallthru
          _
        // Predicated region
        $region25: #{tpu_custom_call.1} parent=11 // pred_check
          %p188 = pneg %p138
        $region26: #{tpu_custom_call.1} parent=11 // pred_check_branch
          %190 = sbr.rel (%p188) target = $region28
        $region27: #{tpu_custom_call.1} parent=11 // pred_region
          _
        $region28: #{tpu_custom_call.1} parent=11 // pred_fallthru
          _
      $region12: #{tpu_custom_call.1} parent=5 // pred_fallthru
        _
      %p191 = scmp.lt.s32.totalorder %s14, 2
      // Predicated region
      $region29: #{tpu_custom_call.1} parent=5 // pred_check
        %p192 = pneg %p191
      $region30: #{tpu_custom_call.1} parent=5 // pred_check_branch
        %194 = sbr.rel (%p192) target = $region32
      $region31: #{tpu_custom_call.1} parent=5 // pred_region
        // Predicated region
        $region33: #{tpu_custom_call.1} parent=31 // pred_check
          %p195 = pneg %p48
        $region34: #{tpu_custom_call.1} parent=31 // pred_check_branch
          %197 = sbr.rel (%p195) target = $region36
        $region35: #{tpu_custom_call.1} parent=31 // pred_region
          %s198 = smul.u32 2, %s22
          %p199 = scmp.lt.s32.totalorder %s21, 1
          %s200 = scalar_select %p199, %s21, 1
          %p201 = scmp.lt.s32.totalorder %s198, 1
          %s202 = scalar_select %p201, %s198, 1
          %s203 = smul.addr %s200, 2
          %s204 = sadd.s32 %s202, %s203
          %s205 = smul.addr %s204, 2
          %s206 = scalar_lea.vmem %s0, %s205
          %s207 = smul.u32 2, %s22
        $region36: #{tpu_custom_call.1} parent=31 // pred_fallthru
          _
      $region32: #{tpu_custom_call.1} parent=5 // pred_fallthru
        _
      %p208 = scmp.le.s32.totalorder 1, %s14
      %p209 = scmp.lt.s32.totalorder %s14, 3
      %p210 = pnand %p208, %p209
      %p211 = pneg %p210
      // Predicated region
      $region37: #{tpu_custom_call.1} parent=5 // pred_check
        _
      $region38: #{tpu_custom_call.1} parent=5 // pred_check_branch
        %213 = sbr.rel (%p210) target = $region40
      $region39: #{tpu_custom_call.1} parent=5 // pred_region
        %s214 = ssub.s32 %s14, 1
        %s215 = smul.u32 2, %s24
        %p216 = scmp.lt.s32.totalorder %s23, 1
        %s217 = scalar_select %p216, %s23, 1
        %p218 = scmp.lt.s32.totalorder %s215, 1
        %s219 = scalar_select %p218, %s215, 1
        %s220 = smul.addr %s217, 2
        %s221 = sadd.s32 %s219, %s220
        %s222 = smul.addr %s221, 2
        %s223 = scalar_lea.vmem %s0, %s222
        %p224 = pneg %p54
        %p225 = pneg %p51
        %p226 = pneg %p75
        %p227 = pneg %p72
        %p228 = pneg %p96
        %p229 = pneg %p93
        %p230 = pneg %p117
        %p231 = pneg %p114
        %p232 = pneg %p138
        %p233 = pneg %p135
        %p234 = pneg %p164
        %p235 = pneg %p161
        %s236 = sand.u32 %s151, 1
        %s237 = scalar_lea.sflag [#allocation4], %s236
        %s238 = sand.u32 %s151, 1
        %s239 = scalar_lea.vmem [#allocation3], %s238
        %s240 = smul.u32 2, %s24
        %p241 = scmp.lt.s32.totalorder %s23, 1
        %s242 = scalar_select %p241, %s23, 1
        %p243 = scmp.lt.s32.totalorder %s240, 1
        %s244 = scalar_select %p243, %s240, 1
        %s245 = smul.addr %s242, 2
        %s246 = sadd.s32 %s244, %s245
        %s247 = smul.addr %s246, 2
        %s248 = scalar_lea.vmem %s0, %s247
        %s249 = smul.u32 2, %s24
        %p251 = scmp.eq.s32.totalorder %s24, 0
        // Predicated region
        $region41: #{tpu_custom_call.1} parent=39 // pred_check
          %p252 = pneg %p251
        $region42: #{tpu_custom_call.1} parent=39 // pred_check_branch
          %254 = sbr.rel (%p252) target = $region44
        $region43: #{tpu_custom_call.1} parent=39 // pred_region
          %vm255 = vcmask 7168
          %256 = vst.msk [vmem:[#allocation2] sm:$0xff] %vm255, 0.0
          %257 = vst.msk [vmem:[#allocation2 + $0x8] sm:$0xff] %vm255, 0.0
          %258 = vst.msk [vmem:[#allocation2 + $0x10] sm:$0xff] %vm255, 0.0
          %259 = vst.msk [vmem:[#allocation2 + $0x18] sm:$0xff] %vm255, 0.0
        $region44: #{tpu_custom_call.1} parent=39 // pred_fallthru
          _
        %v260 = vld [vmem:[%s2] sm:$0xff]
        %v261 = vld [vmem:[%s2 + $0x8] sm:$0xff]
        %v262 = vld [vmem:[%s2 + $0x10] sm:$0xff]
        %v263 = vld [vmem:[%s2 + $0x18] sm:$0xff]
        %v264 = vld [vmem:[%s248] sm:$0xf]
        %v265 = vld [vmem:[%s1] sm:$0xf]
        %v266 = vld [vmem:[%s1 + $0x4] sm:$0xf]
        %v267 = vld [vmem:[%s1 + $0x8] sm:$0xf]
        %v268 = vld [vmem:[%s1 + $0xc] sm:$0xf]
        %v273 = vunpack.c.l.b16 %v265
        %v274 = vunpack.c.l.b16 %v266
        %v275 = vunpack.c.l.b16 %v267
        %v276 = vunpack.c.l.b16 %v268
        %v277 = vpack.c.b16 %v274, %v273
        %v278 = vpack.c.b16 %v276, %v275
        %280 = vst [vmem:[#allocation1] ss:$4 sm:$0xff] %v264
        %v281 = vld.sshfl [vmem:[#allocation1] sm:$0xff pattern:$0x73625140]
        %v282 = vld.sshfl [vmem:[#allocation1 + $0x8] sm:$0xff pattern:$0x73625140]
        %vm283 = vcmask 31744
        %v285 = vsel %vm283, %v277, 0
        %v288 = vsel %vm283, %v278, 0
        %vm290 = vcmask 1041408
        %v291 = vsel %vm290, %v281, 0
        %v293 = vsel %vm290, %v282, 0
        %295 = vmatpush.bf16.msra.mxu0 0
        %296 = vmatpush.bf16.msra.mxu0 0
        %297 = vmatpush.bf16.msra.mxu0 0
        %298 = vmatpush.bf16.msra.mxu0 0
        %299 = vmatpush.bf16.msra.mxu0 0
        %300 = vmatpush.bf16.msra.mxu0 0
        %301 = vmatpush.bf16.msra.mxu0 0
        %302 = vmatpush.bf16.msra.mxu0 %v291
        %303 = vmatmul.bf16.gmra.mxu0 %v285
        %v304 = vpop.f32.mrf.mxu0
        %v305 = vadd.f32 0.0, %v304
        %v306 = vpop.f32.mrf.mxu0
        %v307 = vadd.f32 0.0, %v306
        %308 = vmatmul.bf16.gmra.mxu0 %v288
        %v309 = vpop.f32.mrf.mxu0
        %v310 = vadd.f32 0.0, %v309
        %v311 = vpop.f32.mrf.mxu0
        %v312 = vadd.f32 0.0, %v311
        %313 = vdwg.mxu0
        %314 = vmatpush.bf16.msra.mxu0 0
        %315 = vmatpush.bf16.msra.mxu0 0
        %316 = vmatpush.bf16.msra.mxu0 0
        %317 = vmatpush.bf16.msra.mxu0 0
        %318 = vmatpush.bf16.msra.mxu0 0
        %319 = vmatpush.bf16.msra.mxu0 0
        %320 = vmatpush.bf16.msra.mxu0 0
        %321 = vmatpush.bf16.msra.mxu0 %v293
        %322 = vmatmul.bf16.gmra.mxu0 %v285
        %v323 = vpop.f32.mrf.mxu0
        %v324 = vadd.f32 0.0, %v323
        %v325 = vpop.f32.mrf.mxu0
        %v326 = vadd.f32 0.0, %v325
        %327 = vmatmul.bf16.gmra.mxu0 %v288
        %v328 = vpop.f32.mrf.mxu0
        %v329 = vadd.f32 0.0, %v328
        %v330 = vpop.f32.mrf.mxu0
        %v331 = vadd.f32 0.0, %v330
        %332 = vdwg.mxu0
        %334 = vset.pattern.permute.xlu0 0
        %335 = vperm.xlu0 %334, %v260
        %v336 = vpop.permute.xlu0 %335
        %339 = vset.pattern.permute.xlu0 0
        %340 = vperm.xlu0 %339, %v261
        %v341 = vpop.permute.xlu0 %340
        %344 = vset.pattern.permute.xlu0 0
        %345 = vperm.xlu0 %344, %v262
        %v346 = vpop.permute.xlu0 %345
        %349 = vset.pattern.permute.xlu0 0
        %350 = vperm.xlu0 %349, %v263
        %v351 = vpop.permute.xlu0 %350
        %v353 = vmax.f32 %v305, %v336
        %v354 = vmax.f32 %v324, %v336
        %v355 = vmax.f32 %v307, %v341
        %v356 = vmax.f32 %v326, %v341
        %v357 = vmax.f32 %v310, %v346
        %v358 = vmax.f32 %v329, %v346
        %v359 = vmax.f32 %v312, %v351
        %v360 = vmax.f32 %v331, %v351
        %v361 = vld [vmem:[#allocation2] sm:$0xff]
        %v362 = vld [vmem:[#allocation2 + $0x8] sm:$0xff]
        %v363 = vld [vmem:[#allocation2 + $0x10] sm:$0xff]
        %v364 = vld [vmem:[#allocation2 + $0x18] sm:$0xff]
        %v365 = vadd.f32 %v353, %v354
        %366 = vadd.xlane.f32.xlu0 %v365
        %v367 = vpop.xlane.xlu0 %366
        %v368 = vadd.f32 %v355, %v356
        %369 = vadd.xlane.f32.xlu0 %v368
        %v370 = vpop.xlane.xlu0 %369
        %v371 = vadd.f32 %v357, %v358
        %372 = vadd.xlane.f32.xlu0 %v371
        %v373 = vpop.xlane.xlu0 %372
        %v374 = vadd.f32 %v359, %v360
        %375 = vadd.xlane.f32.xlu0 %v374
        %v376 = vpop.xlane.xlu0 %375
        %v377 = vadd.f32 %v361, %v367
        %v378 = vadd.f32 %v362, %v370
        %v379 = vadd.f32 %v363, %v373
        %v380 = vadd.f32 %v364, %v376
        %vm381 = vcmask 7168
        %382 = vst.msk [vmem:[#allocation2] sm:$0xff] %vm381, %v377
        %383 = vst.msk [vmem:[#allocation2 + $0x8] sm:$0xff] %vm381, %v378
        %384 = vst.msk [vmem:[#allocation2 + $0x10] sm:$0xff] %vm381, %v379
        %385 = vst.msk [vmem:[#allocation2 + $0x18] sm:$0xff] %vm381, %v380
        // Predicated region
        $region45: #{tpu_custom_call.1} parent=39 // pred_check
          %p386 = pneg %p251
        $region46: #{tpu_custom_call.1} parent=39 // pred_check_branch
          %388 = sbr.rel (%p386) target = $region48
        $region47: #{tpu_custom_call.1} parent=39 // pred_region
          %v389 = vld [vmem:[%s2] sm:$0xff]
          %v390 = vld [vmem:[%s2 + $0x8] sm:$0xff]
          %v391 = vld [vmem:[%s2 + $0x10] sm:$0xff]
          %v392 = vld [vmem:[%s2 + $0x18] sm:$0xff]
          %v393 = vld [vmem:[#allocation2] sm:$0xff]
          %v394 = vld [vmem:[#allocation2 + $0x8] sm:$0xff]
          %v395 = vld [vmem:[#allocation2 + $0x10] sm:$0xff]
          %v396 = vld [vmem:[#allocation2 + $0x18] sm:$0xff]
          %v397 = vmul.f32 %v393, 0.00390625
          %v398 = vmul.f32 %v394, 0.00390625
          %v399 = vmul.f32 %v395, 0.00390625
          %v400 = vmul.f32 %v396, 0.00390625
          %v401 = vsub.f32 %v397, %v260
          %v402 = vsub.f32 %v398, %v261
          %v403 = vsub.f32 %v399, %v262
          %v404 = vsub.f32 %v400, %v263
          %v405 = vsel %vm381, %v401, 0.0
          %v406 = vsel %vm381, %v402, 0.0
          %v407 = vadd.f32 %v405, %v406
          %v408 = vsel %vm381, %v403, 0.0
          %v409 = vadd.f32 %v407, %v408
          %v410 = vsel %vm381, %v404, 0.0
          %v411 = vadd.f32 %v409, %v410
          %v412 = vrot.slane %v411, 4
          %v413 = vadd.f32 %v411, %v412
          %v414 = vrot.slane %v413, 2
          %v415 = vadd.f32 %v413, %v414
          %v416 = vrot.slane %v415, 1
          %v417 = vadd.f32 %v415, %v416
          %v418 = vrcp.pop 32.0
          %v419 = vmul.f32 32.0, %v418
          %v420 = vsub.f32 1.0, %v419
          %v421 = vmul.f32 %v418, %v420
          %v422 = vadd.f32 %v418, %v421
          %vm423 = vweird.f32 %v418
          %v424 = vsel %vm423, %v418, %v422
          %v425 = vmul.f32 %v417, %v424
          %v426 = vsub.f32 %v401, %v425
          %v427 = vsub.f32 %v402, %v425
          %v428 = vsub.f32 %v403, %v425
          %v429 = vsub.f32 %v404, %v425
          %v430 = vmul.f32 %v426, %v426
          %v431 = vmul.f32 %v427, %v427
          %v432 = vmul.f32 %v428, %v428
          %v433 = vmul.f32 %v429, %v429
          %v434 = vsel %vm381, %v430, 0.0
          %v435 = vsel %vm381, %v431, 0.0
          %v436 = vadd.f32 %v434, %v435
          %v437 = vsel %vm381, %v432, 0.0
          %v438 = vadd.f32 %v436, %v437
          %v439 = vsel %vm381, %v433, 0.0
          %v440 = vadd.f32 %v438, %v439
          %v441 = vrot.slane %v440, 4
          %v442 = vadd.f32 %v440, %v441
          %v443 = vrot.slane %v442, 2
          %v444 = vadd.f32 %v442, %v443
          %v445 = vrot.slane %v444, 1
          %v446 = vadd.f32 %v444, %v445
          %v447 = vmul.f32 %v446, %v424
          %v448 = vadd.f32 %v447, 1e-06
          %v449 = vrsqrt.pop %v448
          %v450 = vmul.f32 %v449, %v448
          %v451 = vmul.f32 %v450, %v449
          %v452 = vmul.f32 0.5, %v451
          %v453 = vsub.f32 1.5, %v452
          %v454 = vmul.f32 %v449, %v453
          %vm455 = vweird.f32 %v448
          %vm456 = vweird.f32 %v449
          %vm457 = vmor %vm455, %vm456
          %v458 = vsel %vm457, %v449, %v454
          %v459 = vmul.f32 %v426, %v458
          %v460 = vmul.f32 %v427, %v458
          %v461 = vmul.f32 %v428, %v458
          %v462 = vmul.f32 %v429, %v458
          %467 = vrot.lane.b32.xlu0 %v389, 127
          %v468 = vpop.permute.xlu0 %467
          %469 = vrot.lane.b32.xlu0 %v390, 127
          %v470 = vpop.permute.xlu0 %469
          %471 = vrot.lane.b32.xlu0 %v391, 127
          %v472 = vpop.permute.xlu0 %471
          %473 = vrot.lane.b32.xlu0 %v392, 127
          %v474 = vpop.permute.xlu0 %473
          %v479 = vmul.f32 %v459, %v468
          %v480 = vmul.f32 %v460, %v470
          %v481 = vmul.f32 %v461, %v472
          %v482 = vmul.f32 %v462, %v474
          %483 = vrot.lane.b32.xlu0 %v389, 126
          %v484 = vpop.permute.xlu0 %483
          %485 = vrot.lane.b32.xlu0 %v390, 126
          %v486 = vpop.permute.xlu0 %485
          %487 = vrot.lane.b32.xlu0 %v391, 126
          %v488 = vpop.permute.xlu0 %487
          %489 = vrot.lane.b32.xlu0 %v392, 126
          %v490 = vpop.permute.xlu0 %489
          %v495 = vadd.f32 %v479, %v484
          %v496 = vadd.f32 %v480, %v486
          %v497 = vadd.f32 %v481, %v488
          %v498 = vadd.f32 %v482, %v490
          %v499 = vld [vmem:[%s3] sm:$0xff]
          %v500 = vld [vmem:[%s3 + $0x8] sm:$0xff]
          %v501 = vld [vmem:[%s3 + $0x10] sm:$0xff]
          %v502 = vld [vmem:[%s3 + $0x18] sm:$0xff]
          %504 = vset.pattern.permute.xlu0 0
          %505 = vperm.xlu0 %504, %v495
          %v506 = vpop.permute.xlu0 %505
          %509 = vset.pattern.permute.xlu0 0
          %510 = vperm.xlu0 %509, %v496
          %v511 = vpop.permute.xlu0 %510
          %514 = vset.pattern.permute.xlu0 0
          %515 = vperm.xlu0 %514, %v497
          %v516 = vpop.permute.xlu0 %515
          %519 = vset.pattern.permute.xlu0 0
          %520 = vperm.xlu0 %519, %v498
          %v521 = vpop.permute.xlu0 %520
          %v523 = vmul.f32 %v506, %v499
          %v524 = vmul.f32 %v511, %v500
          %v525 = vmul.f32 %v516, %v501
          %v526 = vmul.f32 %v521, %v502
          %vm527 = vcmask 162816
          %v528 = vsel %vm527, %v523, 0.0
          %v529 = vsel %vm527, %v524, 0.0
          %v530 = vadd.f32 %v528, %v529
          %v531 = vsel %vm527, %v525, 0.0
          %v532 = vadd.f32 %v530, %v531
          %v533 = vsel %vm527, %v526, 0.0
          %v534 = vadd.f32 %v532, %v533
          %v535 = vrot.slane %v534, 4
          %v536 = vadd.f32 %v534, %v535
          %v537 = vrot.slane %v536, 2
          %v538 = vadd.f32 %v536, %v537
          %v539 = vrot.slane %v538, 1
          %v540 = vadd.f32 %v538, %v539
          %v541 = vld [vmem:[%s4] sm:$0x1]
          %v542 = vadd.f32 %v540, %v541
          %vm543 = vcmask 155648
          %544 = vst.msk [vmem:[%s239] sm:$0x1] %vm543, %v542
        $region48: #{tpu_custom_call.1} parent=39 // pred_fallthru
          _
        %s545 = sand.u32 %s151, 1
        %s546 = scalar_lea.sflag [#allocation4], %s545
        %s547 = sand.u32 %s151, 1
        %s548 = scalar_lea.vmem [#allocation3], %s547
        // Predicated region
        $region49: #{tpu_custom_call.1} parent=39 // pred_check
          %p549 = pneg %p161
        $region50: #{tpu_custom_call.1} parent=39 // pred_check_branch
          %551 = sbr.rel (%p549) target = $region52
        $region51: #{tpu_custom_call.1} parent=39 // pred_region
          %553 = vsyncadd %s546, 0
          %s554 = scalar_lea.hbm %s5, %s23
          %s556 = sshll.u32 %s548, 4
          %s557 = int_to_ptr.vmem [resolvable:$true] %s556
          %s558 = sshll.u32 %s554, 4
          %s559 = int_to_ptr.hbm [resolvable:$true] %s558
          %561 = dma.vmem_to_hbm [thread:$0]  %s557, 16, %s559, %s546
        $region52: #{tpu_custom_call.1} parent=39 // pred_fallthru
          _
      $region40: #{tpu_custom_call.1} parent=5 // pred_fallthru
        _
      %p562 = scmp.le.s32.totalorder 2, %s14
      // Predicated region
      $region53: #{tpu_custom_call.1} parent=5 // pred_check
        %p563 = pneg %p562
      $region54: #{tpu_custom_call.1} parent=5 // pred_check_branch
        %565 = sbr.rel (%p563) target = $region56
      $region55: #{tpu_custom_call.1} parent=5 // pred_region
        %s566 = ssub.s32 %s14, 2
        // Predicated region
        $region57: #{tpu_custom_call.1} parent=55 // pred_check
          %p567 = pneg %p167
        $region58: #{tpu_custom_call.1} parent=55 // pred_check_branch
          %569 = sbr.rel (%p567) target = $region60
        $region59: #{tpu_custom_call.1} parent=55 // pred_region
          %s570 = sand.u32 %s152, 1
          %s571 = scalar_lea.sflag [#allocation4], %s570
          %s572 = sand.u32 %s152, 1
          %s573 = scalar_lea.vmem [#allocation3], %s572
          %575 = dma.done %s571, 16
        $region60: #{tpu_custom_call.1} parent=55 // pred_fallthru
          _
      $region56: #{tpu_custom_call.1} parent=5 // pred_fallthru
        _
    $region6: #{tpu_custom_call.1} parent=1 // loop_footer
      %s18 = sadd.s32 1, %s14
    $region7: #{tpu_custom_call.1} parent=1 // loop_footer_branch
      %13 = sbr.rel target = $region3
    $region8: #{tpu_custom_call.1} parent=1 // loop_exit
      _
    %576 = vsyncpa [#allocation4], 1
    %s577 = scalar_lea.sflag [#allocation4], 1
    %578 = vsyncpa %s577, 1

</llo_original>
